<compile_context>
chip_gen: v5e
topology: v5e:2x2
jax: 0.10.0
libtpu: 0.0.40
codegen_flags: <defaults>
</compile_context>

<pallas_src>
import functools

import numpy as np
import jax
import jax.numpy as jnp
from jax.experimental import pallas as pl
from jax.experimental.pallas import tpu as pltpu

_LANES = 128
_SUBLANES = 8


def _next_pow2(x):
    return 1 if x <= 1 else 1 << (int(x) - 1).bit_length()


def _num_tensorcores():
    # v7x has 2 TensorCores per chip; v5e / v6e have 1.  The explicit per-core
    # grid axis only pays off on v7x, so default to 1 elsewhere.
    try:
        kind = jax.devices()[0].device_kind.lower()
    except Exception:
        return 1
    return 2 if ("v7" in kind or "7x" in kind) else 1


def _vmem_capacity_bytes():
    try:
        info = pltpu.get_tpu_info()
        return int(getattr(info, "vmem_capacity_bytes", 64 * 1024 * 1024))
    except Exception:
        return 64 * 1024 * 1024          # conservative (v7x-sized) fallback


# ---------------------------------------------------------------------------
# Host-side triplet mining (deterministic stand-in for libs.build_triplets).
# TODO(synk): exact libs.build_triplets mining heuristic is not available; this
# deterministically pairs each anchor with all same-class positives and its
# n_target closest different-class negatives (the original also mines on CPU).
# ---------------------------------------------------------------------------
def build_triplets_np(inputs, targets, n_target=5):
    inputs = np.asarray(inputs, dtype=np.float32)
    targets = np.asarray(targets)
    n = targets.shape[0]
    d2 = ((inputs[:, None, :] - inputs[None, :, :]) ** 2).sum(-1)
    anchors, positives, negatives = [], [], []
    idx = np.arange(n)
    for a in range(n):
        pos_idx = idx[(targets == targets[a]) & (idx != a)]
        neg_idx = idx[targets != targets[a]]
        if len(pos_idx) == 0 or len(neg_idx) == 0:
            continue
        neg_sorted = neg_idx[np.argsort(d2[a, neg_idx], kind="stable")][:n_target]
        for p in pos_idx:
            for g in neg_sorted:
                anchors.append(a)
                positives.append(p)
                negatives.append(g)
    if len(anchors) == 0:
        return np.zeros((3, 0), dtype=np.int64)
    return np.stack(
        [np.asarray(anchors), np.asarray(positives), np.asarray(negatives)]
    ).astype(np.int64)


# ---------------------------------------------------------------------------
# Pallas kernel.
#   n_ref, margin_ref : SMEM scalars (scalar prefetch)
#   x3_hbm            : (3, D_pad, N_pad) bf16 HBM ref (hi/mid/lo f32 split)
#   idx_ref           : (1, 1, 3*TBLK) int32 [anchor|positive|negative] strip
#   out_ref           : (8, 128) f32 per-core partial (broadcast store)
#   x3_vmem           : (3, D_pad, N_pad) bf16 VMEM scratch (single-buffered)
#   acc_ref           : (1, TBLK) f32 VMEM lane-parallel accumulator
# ---------------------------------------------------------------------------
def _triplet_hinge_kernel(n_ref, margin_ref, x3_hbm, idx_ref, out_ref,
                          x3_vmem, acc_ref, *, tblk, blocks_per_core, n_rows):
    c = pl.program_id(0)
    i = pl.program_id(1)

    @pl.when(i == 0)
    def _():
        # One blocking DMA of the bf16-split embeddings; stays resident (and
        # single-buffered) for the rest of this core's grid slice.
        pltpu.sync_copy(x3_hbm, x3_vmem)
        acc_ref[...] = jnp.zeros_like(acc_ref)

    # Lane-contiguous [a | t | g] index strip for this block.
    idx = idx_ref[0]                                            # (1, 3*tblk)
    row_iota = jax.lax.broadcasted_iota(jnp.int32, (n_rows, 1), 0)
    onehot = (row_iota == idx).astype(jnp.bfloat16)             # (N_pad, 3*tblk)

    # Fused gather: one DEFAULT-precision bf16 matmul per split term, f32
    # accumulation.  One-hot entries are exact in bf16 and exactly one row is
    # selected per column, so hi+mid+lo reconstructs the f32 rows exactly.
    gat = (jnp.dot(x3_vmem[0], onehot, preferred_element_type=jnp.float32)
           + jnp.dot(x3_vmem[1], onehot, preferred_element_type=jnp.float32)
           + jnp.dot(x3_vmem[2], onehot, preferred_element_type=jnp.float32))

    a = gat[:, 0 * tblk:1 * tblk]
    t = gat[:, 1 * tblk:2 * tblk]
    g = gat[:, 2 * tblk:3 * tblk]

    # pos - neg == sum_D (t - g) * (t + g - 2a)   (fused: 1 mul + 1 reduce)
    diff = jnp.sum((t - g) * ((t + g) - 2.0 * a), axis=0, keepdims=True)
    hinge = jnp.maximum(diff + margin_ref[0], 0.0)              # (1, tblk)

    # Mask padded triplet columns (padded indices select row 0 -> += margin).
    blk = c * blocks_per_core + i
    col = blk * tblk + jax.lax.broadcasted_iota(jnp.int32, (1, tblk), 1)
    hinge = jnp.where(col < n_ref[0], hinge, 0.0)

    # Lane-parallel accumulation (pure VALU adds); no per-step cross-lane
    # reduction and no serializing (1,1) scalar read-modify-write.
    acc_ref[...] += hinge

    @pl.when(i == pl.num_programs(1) - 1)
    def _():
        out_ref[...] = jnp.broadcast_to(
            jnp.sum(acc_ref[...]).reshape(1, 1), out_ref.shape)


# ---------------------------------------------------------------------------
def triplet_loss_pallas(inputs, targets, margin=0.2, n_targets=5, tblk=2048):
    """Returns the (1, 1) float32 triplet loss, matching the PyTorch module."""
    inputs = jnp.asarray(inputs, dtype=jnp.float32)
    T = build_triplets_np(np.asarray(inputs), np.asarray(targets), n_target=n_targets)
    if T.shape[1] == 0:
        return jnp.zeros((1, 1), dtype=jnp.float32)

    n = int(T.shape[1])
    N, D = inputs.shape
    num_cores = _num_tensorcores()

    # bf16 sublane tiling is (16, 128): pad D to 16, N to 128.
    D_pad = -(-D // 16) * 16
    N_pad = -(-N // _LANES) * _LANES

    # Exact 3-way bf16 split of the (transposed, zero-padded) embeddings.
    xT = jnp.zeros((D_pad, N_pad), jnp.float32).at[:D, :N].set(inputs.T)
    hi = xT.astype(jnp.bfloat16)
    r1 = xT - hi.astype(jnp.float32)
    mid = r1.astype(jnp.bfloat16)
    lo = (r1 - mid.astype(jnp.float32)).astype(jnp.bfloat16)
    x3 = jnp.stack([hi, mid, lo], axis=0)          # (3, D_pad, N_pad) bf16

    # --- generation-aware VMEM budget / tile sizing ------------------------
    vmem_cap = _vmem_capacity_bytes()              # 64 MiB v7x, 128 MiB v5e/v6e
    vmem_limit = max(32 * 1024 * 1024, int(vmem_cap * 0.85))
    resident = 2 * 3 * D_pad * N_pad               # single-buffered bf16 scratch
    fixed_slack = 2 * 1024 * 1024
    # Per triplet column: bf16 one-hot (3 cols), f32 matmul partials, a/t/g
    # slices + elementwise temps (conservative), double-buffered idx block.
    per_col = 6 * N_pad + 80 * D_pad + 64
    budget = max(0, vmem_limit - resident - fixed_slack)
    tblk_cap = max(_LANES, (budget // per_col) // _LANES * _LANES)

    # Bucket the mined triplet count to a power of two so repeated calls with
    # different n reuse the same compiled kernel geometry.
    n_bucket = max(_LANES, _next_pow2(n))
    tblk_eff = int(min(max(_LANES, (tblk // _LANES) * _LANES), tblk_cap, n_bucket))

    blocks_total = -(-n_bucket // tblk_eff)
    blocks_total = num_cores * (-(-blocks_total // num_cores))
    blocks_per_core = blocks_total // num_cores
    n_pad = blocks_total * tblk_eff

    # TODO(synk): for large N (>= ~512-1024) the one-hot MXU gather scales with
    # N*D*T; a per-row DMA-gather path (embeddings in pl.ANY, manual
    # make_async_copy of triplet rows) would make it bandwidth-bound instead.

    # Lane-contiguous [a | t | g] strip per block (fused single-matmul gather).
    T_pad = np.zeros((3, n_pad), dtype=np.int32)
    T_pad[:, :n] = T.astype(np.int32)
    idx = (T_pad.reshape(3, blocks_total, tblk_eff)
                .transpose(1, 0, 2)
                .reshape(blocks_total, 1, 3 * tblk_eff))
    idx = jnp.asarray(idx)

    n_smem = jnp.array([n], dtype=jnp.int32)
    margin_smem = jnp.array([float(margin)], dtype=jnp.float32)

    kernel = functools.partial(_triplet_hinge_kernel, tblk=tblk_eff,
                               blocks_per_core=blocks_per_core, n_rows=N_pad)

    out = pl.pallas_call(
        kernel,
        out_shape=jax.ShapeDtypeStruct((num_cores * _SUBLANES, _LANES), jnp.float32),
        grid_spec=pltpu.PrefetchScalarGridSpec(
            num_scalar_prefetch=2,
            grid=(num_cores, blocks_per_core),
            in_specs=[
                # Raw HBM ref; copied once per core into a single-buffered VMEM
                # scratch inside the kernel (no BlockSpec double buffer).
                pl.BlockSpec(memory_space=pl.ANY),
                # Triplet-index strips, streamed lane-dense block by block.
                pl.BlockSpec((1, 1, 3 * tblk_eff),
                             lambda c, i, n_s, m_s: (c * blocks_per_core + i, 0, 0)),
            ],
            out_specs=pl.BlockSpec((_SUBLANES, _LANES),
                                   lambda c, i, n_s, m_s: (c, 0)),
            scratch_shapes=[
                pltpu.VMEM((3, D_pad, N_pad), jnp.bfloat16),   # resident embeddings
                pltpu.VMEM((1, tblk_eff), jnp.float32),        # wide accumulator
            ],
        ),
        compiler_params=pltpu.CompilerParams(
            dimension_semantics=("parallel", "arbitrary"),
            vmem_limit_bytes=int(vmem_limit),
        ),
    )(n_smem, margin_smem, x3, idx)

    partials = out[::_SUBLANES, 0]          # one partial scalar per core
    return (jnp.sum(partials) / jnp.float32(n)).reshape(1, 1)


# ---------------------------------------------------------------------------
def _reference_loss(inputs, T, margin):
    """Pure-JAX reference of the PyTorch blocked loop (for a sanity check)."""
    anc = inputs[T[0]]
    tar = inputs[T[1]]
    imp = inputs[T[2]]
    pos = jnp.sum((tar - anc) ** 2, axis=1, keepdims=True)
    neg = jnp.sum((imp - anc) ** 2, axis=1, keepdims=True)
    return jnp.sum(jnp.clip(pos + margin - neg, 0.0), axis=0, keepdims=True) / T.shape[1]


if __name__ == "__main__":
    key = jax.random.PRNGKey(0)
    k1, k2 = jax.random.split(key)
    N, D = 16, 32
    inputs = jax.random.normal(k1, (N, D), dtype=jnp.float32)
    targets = jax.random.randint(k2, (N,), 0, 4, dtype=jnp.int32)

    margin, n_targets = 0.2, 5
    loss = triplet_loss_pallas(inputs, targets, margin=margin, n_targets=n_targets)
    loss = jax.block_until_ready(loss)

    T = build_triplets_np(np.asarray(inputs), np.asarray(targets), n_target=n_targets)
    ref = _reference_loss(inputs, T, margin)
    # Fused (pos - neg) form + lane-parallel f32 re-summation -> tiny numeric
    # differences vs. the reference's sum-of-squares order; tolerance documents it.
    assert np.allclose(np.asarray(loss), np.asarray(ref), rtol=1e-4, atol=1e-4), (loss, ref)

    print("KERNEL_OK")
</pallas_src>

<mosaic_0001>
module attributes {stable_mosaic.version = 11 : i64} {
  func.func @_triplet_hinge_kernel(%arg0: i32, %arg1: i32, %arg2: memref<1xi32, #tpu.memory_space<smem>>, %arg3: memref<1xf32, #tpu.memory_space<smem>>, %arg4: memref<3x32x128xbf16, #tpu.memory_space<any>>, %arg5: memref<1x1x768xi32, #tpu.memory_space<vmem>>, %arg6: memref<8x128xf32, #tpu.memory_space<vmem>>, %arg7: memref<3x32x128xbf16, #tpu.memory_space<vmem>>, %arg8: memref<1x256xf32, #tpu.memory_space<vmem>>) attributes {dimension_semantics = [#tpu.dimension_semantics<parallel>, #tpu.dimension_semantics<arbitrary>], iteration_bounds = array<i64: 1, 1>, scalar_prefetch = 2 : i64, scratch_operands = 2 : i64, tpu.core_type = #tpu.core_type<tc>, window_params = [{}, {transform_indices = @transform_1, window_bounds = array<i64: 1, 1, 768>}, {transform_indices = @transform_2, window_bounds = array<i64: 8, 128>}]} {
    %c0_i32 = arith.constant 0 : i32
    %0 = arith.cmpi eq, %arg1, %c0_i32 : i32
    %1 = arith.extui %0 : i1 to i32
    %c0_i32_0 = arith.constant 0 : i32
    %2 = arith.cmpi ne, %1, %c0_i32_0 : i32
    scf.if %2 {
      "tpu.region"() ({
        %58 = tpu.sem_alloc : memref<!tpu.dma_semaphore, #tpu.memory_space<semaphore_mem>>
        tpu.enqueue_dma source(%arg4 : memref<3x32x128xbf16, #tpu.memory_space<any>>) target(%arg7 : memref<3x32x128xbf16, #tpu.memory_space<vmem>>) target_semaphore(%58 : memref<!tpu.dma_semaphore, #tpu.memory_space<semaphore_mem>>)
        tpu.wait_dma2 semaphore(%58 : memref<!tpu.dma_semaphore, #tpu.memory_space<semaphore_mem>>) src(%arg4 : memref<3x32x128xbf16, #tpu.memory_space<any>>) dst(%arg7 : memref<3x32x128xbf16, #tpu.memory_space<vmem>>)
        tpu.yield
      }) : () -> ()
      %cst_24 = arith.constant 0.000000e+00 : f32
      %56 = vector.broadcast %cst_24 : f32 to vector<1x256xf32>
      %c0_25 = arith.constant 0 : index
      %c0_26 = arith.constant 0 : index
      %57 = vector.load %arg8[%c0_25, %c0_26] : memref<1x256xf32, #tpu.memory_space<vmem>>, vector<1x256xf32>
      tpu.vector_store %arg8[%c0_25, %c0_26], %56 {strides = array<i32>} : memref<1x256xf32, #tpu.memory_space<vmem>>, vector<1x256xf32>,
    } else {
    }
    %c0 = arith.constant 0 : index
    %c0_1 = arith.constant 0 : index
    %c0_2 = arith.constant 0 : index
    %3 = vector.load %arg5[%c0, %c0_1, %c0_2] : memref<1x1x768xi32, #tpu.memory_space<vmem>>, vector<1x1x768xi32>
    %4 = vector.shape_cast %3 : vector<1x1x768xi32> to vector<1x768xi32>
    %5 = tpu.iota {dimensions = array<i32: 0>} : vector<128x1xi32>
    %6 = vector.broadcast %5 : vector<128x1xi32> to vector<128x768xi32>
    %7 = vector.broadcast %4 : vector<1x768xi32> to vector<128x768xi32>
    %8 = arith.cmpi eq, %6, %7 : vector<128x768xi32>
    %9 = arith.extui %8 : vector<128x768xi1> to vector<128x768xi32>
    %10 = arith.sitofp %9 : vector<128x768xi32> to vector<128x768xf32>
    %11 = arith.truncf %10 : vector<128x768xf32> to vector<128x768xbf16>
    %c0_3 = arith.constant 0 : index
    %c0_4 = arith.constant 0 : index
    %c0_5 = arith.constant 0 : index
    %12 = vector.load %arg7[%c0_3, %c0_4, %c0_5] : memref<3x32x128xbf16, #tpu.memory_space<vmem>>, vector<1x32x128xbf16>
    %13 = vector.shape_cast %12 : vector<1x32x128xbf16> to vector<32x128xbf16>
    %cst = arith.constant dense<0.000000e+00> : vector<32x768xf32>
    %14 = tpu.matmul %13, %11, %cst {dimension_numbers = #tpu.dot_dimension_numbers<[1], [0], [0], [1], [0, 0, 1, 1], [], []>} : vector<32x128xbf16>, vector<128x768xbf16>, vector<32x768xf32> -> vector<32x768xf32>
    %c1 = arith.constant 1 : index
    %c0_6 = arith.constant 0 : index
    %c0_7 = arith.constant 0 : index
    %15 = vector.load %arg7[%c1, %c0_6, %c0_7] : memref<3x32x128xbf16, #tpu.memory_space<vmem>>, vector<1x32x128xbf16>
    %16 = vector.shape_cast %15 : vector<1x32x128xbf16> to vector<32x128xbf16>
    %cst_8 = arith.constant dense<0.000000e+00> : vector<32x768xf32>
    %17 = tpu.matmul %16, %11, %cst_8 {dimension_numbers = #tpu.dot_dimension_numbers<[1], [0], [0], [1], [0, 0, 1, 1], [], []>} : vector<32x128xbf16>, vector<128x768xbf16>, vector<32x768xf32> -> vector<32x768xf32>
    %18 = arith.addf %14, %17 : vector<32x768xf32>
    %c2 = arith.constant 2 : index
    %c0_9 = arith.constant 0 : index
    %c0_10 = arith.constant 0 : index
    %19 = vector.load %arg7[%c2, %c0_9, %c0_10] : memref<3x32x128xbf16, #tpu.memory_space<vmem>>, vector<1x32x128xbf16>
    %20 = vector.shape_cast %19 : vector<1x32x128xbf16> to vector<32x128xbf16>
    %cst_11 = arith.constant dense<0.000000e+00> : vector<32x768xf32>
    %21 = tpu.matmul %20, %11, %cst_11 {dimension_numbers = #tpu.dot_dimension_numbers<[1], [0], [0], [1], [0, 0, 1, 1], [], []>} : vector<32x128xbf16>, vector<128x768xbf16>, vector<32x768xf32> -> vector<32x768xf32>
    %22 = arith.addf %18, %21 : vector<32x768xf32>
    %23 = vector.extract_strided_slice %22 {offsets = [0, 0], sizes = [32, 256], strides = [1, 1]} : vector<32x768xf32> to vector<32x256xf32>
    %24 = vector.extract_strided_slice %22 {offsets = [0, 256], sizes = [32, 256], strides = [1, 1]} : vector<32x768xf32> to vector<32x256xf32>
    %25 = vector.extract_strided_slice %22 {offsets = [0, 512], sizes = [32, 256], strides = [1, 1]} : vector<32x768xf32> to vector<32x256xf32>
    %26 = arith.subf %24, %25 : vector<32x256xf32>
    %27 = arith.addf %24, %25 : vector<32x256xf32>
    %cst_12 = arith.constant 2.000000e+00 : f32
    %28 = vector.broadcast %cst_12 : f32 to vector<32x256xf32>
    %29 = arith.mulf %28, %23 : vector<32x256xf32>
    %30 = arith.subf %27, %29 : vector<32x256xf32>
    %31 = arith.mulf %26, %30 : vector<32x256xf32>
    %cst_13 = arith.constant dense<0.000000e+00> : vector<256xf32>
    %32 = vector.multi_reduction <add>, %31, %cst_13 [0] : vector<32x256xf32> to vector<256xf32>
    %33 = vector.shape_cast %32 : vector<256xf32> to vector<1x256xf32>
    %c0_14 = arith.constant 0 : index
    %34 = memref.load %arg3[%c0_14] : memref<1xf32, #tpu.memory_space<smem>>
    %35 = vector.broadcast %34 : f32 to vector<1x256xf32>
    %36 = arith.addf %33, %35 : vector<1x256xf32>
    %cst_15 = arith.constant 0.000000e+00 : f32
    %37 = vector.broadcast %cst_15 : f32 to vector<1x256xf32>
    %38 = arith.maximumf %36, %37 : vector<1x256xf32>
    %c1_i32 = arith.constant 1 : i32
    %39 = arith.muli %arg0, %c1_i32 : i32
    %40 = arith.addi %39, %arg1 : i32
    %c256_i32 = arith.constant 256 : i32
    %41 = arith.muli %40, %c256_i32 : i32
    %42 = tpu.iota {dimensions = array<i32: 1>} : vector<1x256xi32>
    %43 = vector.broadcast %41 : i32 to vector<1x256xi32>
    %44 = arith.addi %43, %42 : vector<1x256xi32>
    %c0_16 = arith.constant 0 : index
    %45 = memref.load %arg2[%c0_16] : memref<1xi32, #tpu.memory_space<smem>>
    %46 = vector.broadcast %45 : i32 to vector<1x256xi32>
    %47 = arith.cmpi slt, %44, %46 : vector<1x256xi32>
    %cst_17 = arith.constant 0.000000e+00 : f32
    %48 = vector.broadcast %cst_17 : f32 to vector<1x256xf32>
    %49 = arith.select %47, %38, %48 : vector<1x256xi1>, vector<1x256xf32>
    %c0_18 = arith.constant 0 : index
    %c0_19 = arith.constant 0 : index
    %50 = vector.load %arg8[%c0_18, %c0_19] : memref<1x256xf32, #tpu.memory_space<vmem>>, vector<1x256xf32>
    %51 = arith.addf %50, %49 : vector<1x256xf32>
    %c0_20 = arith.constant 0 : index
    %c0_21 = arith.constant 0 : index
    %52 = vector.load %arg8[%c0_20, %c0_21] : memref<1x256xf32, #tpu.memory_space<vmem>>, vector<1x256xf32>
    tpu.vector_store %arg8[%c0_20, %c0_21], %51 {strides = array<i32>} : memref<1x256xf32, #tpu.memory_space<vmem>>, vector<1x256xf32>,
    %c0_i32_22 = arith.constant 0 : i32
    %53 = arith.cmpi eq, %arg1, %c0_i32_22 : i32
    %54 = arith.extui %53 : i1 to i32
    %c0_i32_23 = arith.constant 0 : i32
    %55 = arith.cmpi ne, %54, %c0_i32_23 : i32
    scf.if %55 {
      %c0_24 = arith.constant 0 : index
      %c0_25 = arith.constant 0 : index
      %56 = vector.load %arg8[%c0_24, %c0_25] : memref<1x256xf32, #tpu.memory_space<vmem>>, vector<1x256xf32>
      %57 = vector.shape_cast %56 : vector<1x256xf32> to vector<1x1x256xf32>
      %cst_26 = arith.constant dense<0.000000e+00> : vector<1xf32>
      %58 = vector.multi_reduction <add>, %57, %cst_26 [1, 2] : vector<1x1x256xf32> to vector<1xf32>
      %59 = vector.shape_cast %58 : vector<1xf32> to vector<1x1x1xf32>
      %60 = vector.extract %59[0, 0, 0] : f32 from vector<1x1x1xf32>
      %61 = vector.broadcast %60 : f32 to vector<1x1xf32>
      %62 = vector.shape_cast %61 : vector<1x1xf32> to vector<1x1xf32>
      %63 = vector.broadcast %62 : vector<1x1xf32> to vector<8x128xf32>
      %c0_27 = arith.constant 0 : index
      %c0_28 = arith.constant 0 : index
      %64 = vector.load %arg6[%c0_27, %c0_28] : memref<8x128xf32, #tpu.memory_space<vmem>>, vector<8x128xf32>
      tpu.vector_store %arg6[%c0_27, %c0_28], %63 {strides = array<i32>} : memref<8x128xf32, #tpu.memory_space<vmem>>, vector<8x128xf32>,
    } else {
    }
    return
  }
  func.func @transform_1(%arg0: i32, %arg1: i32, %arg2: memref<1xi32, #tpu.memory_space<smem>>, %arg3: memref<1xf32, #tpu.memory_space<smem>>) -> (i32, i32, i32) {
    %c1_i32 = arith.constant 1 : i32
    %0 = arith.muli %arg0, %c1_i32 : i32
    %1 = arith.addi %0, %arg1 : i32
    %c0_i32 = arith.constant 0 : i32
    %c0_i32_0 = arith.constant 0 : i32
    %c0_i32_1 = arith.constant 0 : i32
    return %1, %c0_i32, %c0_i32_0 : i32, i32, i32
  }
  func.func @transform_2(%arg0: i32, %arg1: i32, %arg2: memref<1xi32, #tpu.memory_space<smem>>, %arg3: memref<1xf32, #tpu.memory_space<smem>>) -> (i32, i32) {
    %c0_i32 = arith.constant 0 : i32
    %c0_i32_0 = arith.constant 0 : i32
    return %arg0, %c0_i32 : i32, i32
  }
}

</mosaic_0001>

<llo_original>
// kernel: tpu_custom_call.1
$region0: #{tpu_custom_call.1}
  #allocation0 [shape = 'u32[]', space=smem, size = 0x4, offset = 0x4, fixed_abs, tag = 'smem constant byte address 0x4 - core index']
  #allocation1 [shape = 'u32[72,128]{1,0:T(1,128)}', space=vmem, size = 0x9000, scoped, tag = 'internal scratch']
  #allocation2 [shape = 'bf16[3,32,128]{2,1,0:T(8,128)(2,1)}', space=vmem, size = 0x6000, scoped, tag = 'scratch operand']
  #allocation3 [shape = 'f32[1,256]{1,0:T(1,128)}', space=vmem, size = 0x400, scoped, tag = 'scratch operand']
  #allocation4 [shape = 's32[1]{0}', space=sflag, size = 0x4, scoped, tag = 'scoped memory for tpu_custom_call.1']
  #allocation5 [shape = 's32[1]{0:T(128)S(6)}', space=smem, size = 0x200, scoped, tag = 'prefetched SMEM operand 0']
  #allocation6 [shape = 'f32[1]{0:T(128)S(6)}', space=smem, size = 0x200, scoped, tag = 'prefetched SMEM operand 1']
  #allocation12 [shape = 's32[]', space=sflag, size = 0x4, offset = 0, fixed_abs, tag = 'sflag constant byte address 0x0 - dummy sync flag']
  #allocation13 [shape = 's32[]', space=sflag, size = 0x4, offset = 0, fixed_abs, tag = 'sflag constant byte address 0x0 - dummy sync flag']
  #allocation14 [shape = 'u32[]', space=smem, size = 0x4, offset = 0x44, fixed_abs, tag = 'smem constant byte address 0x44 - assertion arg 0']
  #allocation15 [shape = 'u32[]', space=smem, size = 0x4, offset = 0x48, fixed_abs, tag = 'smem constant byte address 0x48 - assertion arg 1']
  %s0 = inlined_call_operand.<no memory space> [shape: s32[1], index: 0, kind: input, shape index: {}]
  %s1 = inlined_call_operand.<no memory space> [shape: f32[1], index: 1, kind: input, shape index: {}]
  %s2 = inlined_call_operand.hbm [shape: bf16[3,32,128], index: 2, kind: input, shape index: {}]
  %s3 = inlined_call_operand.hbm [shape: s32[1,1,768], index: 3, kind: input, shape index: {}]
  %s4 = inlined_call_operand.hbm [shape: f32[8,128], index: 4, kind: output, shape index: {}]
  %s5 = sld [smem:[#allocation0]]
  $region31: #{tpu_custom_call.1} parent=0
    _
  %s7 = ssub.s32 1, %s5
  %s8 = scalar_select 0, %s7, %s5
  %9 = sst [smem:[#allocation5]] %s0
  %10 = sst [smem:[#allocation6]] %s1
  $region1: #{tpu_custom_call.1} parent=0
    #allocation7 [shape = 'u8[3072]{0}', space=vmem, size = 0xc00, scoped, tag = 'input window, operand 3, single buffered']
    #allocation8 [shape = 's32[1]{0}', space=sflag, size = 0x4, scoped, tag = 'scoped memory for tpu_custom_call.1']
    #allocation9 [shape = 's32[1]{0}', space=sflag, size = 0x4, scoped, tag = 'scoped memory for tpu_custom_call.1']
    #allocation10 [shape = 'u8[4096]{0}', space=vmem, size = 0x1000, scoped, tag = 'output window, operand 0, single buffered']
    %11 = vsyncpa [#allocation8], 0
    %12 = vsyncpa [#allocation9], 0
    // Predicated region
    $region2: #{tpu_custom_call.1} parent=1 // pred_check
      _
    $region3: #{tpu_custom_call.1} parent=1 // pred_check_branch
      %14 = sbr.rel (0) target = $region5
    $region4: #{tpu_custom_call.1} parent=1 // pred_region
      %s15 = sadd.s32 0, 0
      %17 = vsyncadd [#allocation8], 0
      %s18 = smul.addr %s15, 6
      %s19 = scalar_lea.hbm %s3, %s18
      %s21 = sshll.u32 %s19, 4
      %s22 = int_to_ptr.hbm [resolvable:$true] %s21
      %s23 = sshll.u32 [#allocation7], 4
      %s24 = int_to_ptr.vmem [resolvable:$true] %s23
      %26 = dma.hbm_to_vmem [thread:$0]  %s22, 96, %s24, [#allocation8]
    $region5: #{tpu_custom_call.1} parent=1 // pred_fallthru
      _
    // Predicated region
    $region6: #{tpu_custom_call.1} parent=1 // pred_check
      _
    $region7: #{tpu_custom_call.1} parent=1 // pred_check_branch
      %28 = sbr.rel (0) target = $region9
    $region8: #{tpu_custom_call.1} parent=1 // pred_region
      %30 = dma.done [#allocation8], 96
    $region9: #{tpu_custom_call.1} parent=1 // pred_fallthru
      _
    %s31 = sadd.s32 0, 0
    %p32 = scmp.eq.s32.totalorder 0, 0
    // Predicated region
    $region10: #{tpu_custom_call.1} parent=1 // pred_check
      %p33 = pneg %p32
    $region11: #{tpu_custom_call.1} parent=1 // pred_check_branch
      %35 = sbr.rel (%p33) target = $region13
    $region12: #{tpu_custom_call.1} parent=1 // pred_region
      $region14: #{tpu_custom_call.1} parent=12
        #allocation11 [shape = 's32[1]{0}', space=sflag, size = 0x4, scoped, tag = 'scoped memory for tpu_custom_call.1']
        // Predicated region
        $region15: #{tpu_custom_call.1} parent=14 // pred_check
          _
        $region16: #{tpu_custom_call.1} parent=14 // pred_check_branch
          %37 = sbr.rel target = $region18
        $region17: #{tpu_custom_call.1} parent=14 // pred_region
          %38 = sst [smem:[#allocation14]] [#allocation13]
          %39 = sst [smem:[#allocation15]] [#allocation12]
        $region18: #{tpu_custom_call.1} parent=14 // pred_fallthru
          _
        %41 = shalt.err (0)
        %s43 = sshll.u32 %s2, 4
        %s44 = int_to_ptr.hbm [resolvable:$true] %s43
        %s45 = sshll.u32 [#allocation2], 4
        %s46 = int_to_ptr.vmem [resolvable:$true] %s45
        %48 = dma.hbm_to_vmem [thread:$0]  %s44, 768, %s46, [#allocation11]
        %s49 = smul.u32 4, 3
        %s50 = smul.u32 %s49, 4
        %s51 = smul.u32 %s50, 1
        %s52 = sshll.u32 %s51, 4
        %53 = dma.done [#allocation11], %s52
      %v54 = vlaneseq
      %vm55 = vcmp.ge.s32.totalorder %v54, 0
      %vm56 = vcmp.lt.s32.totalorder %v54, 256
      %vm57 = vmand %vm55, %vm56
      %58 = vst.msk [vmem:[#allocation3] sm:$0x3] %vm57, 0.0
    $region13: #{tpu_custom_call.1} parent=1 // pred_fallthru
      _
    %v59 = vld [vmem:[#allocation7] sm:$0x3f]
    %v60 = vlaneseq
    %v61 = vshrl.u32 %v60, 7
    %v62 = vadd.s32 %v61, 8
    %v63 = vadd.s32 %v61, 16
    %v64 = vadd.s32 %v61, 24
    %v65 = vadd.s32 %v61, 32
    %v66 = vadd.s32 %v61, 40
    %v67 = vadd.s32 %v61, 48
    %v68 = vadd.s32 %v61, 56
    %v69 = vadd.s32 %v61, 64
    %v70 = vadd.s32 %v61, 72
    %v71 = vadd.s32 %v61, 80
    %v72 = vadd.s32 %v61, 88
    %v73 = vadd.s32 %v61, 96
    %v74 = vadd.s32 %v61, 104
    %v75 = vadd.s32 %v61, 112
    %v76 = vadd.s32 %v61, 120
    %v77 = vperm.slane %v59, 0
    %v78 = vperm.slane %v59, 1
    %v79 = vperm.slane %v59, 2
    %v80 = vperm.slane %v59, 3
    %v81 = vperm.slane %v59, 4
    %v82 = vperm.slane %v59, 5
    %vm83 = vcmp.eq.s32.totalorder %v61, %v77
    %vm84 = vcmp.eq.s32.totalorder %v61, %v78
    %vm85 = vcmp.eq.s32.totalorder %v61, %v79
    %vm86 = vcmp.eq.s32.totalorder %v61, %v80
    %vm87 = vcmp.eq.s32.totalorder %v61, %v81
    %vm88 = vcmp.eq.s32.totalorder %v61, %v82
    %vm89 = vcmp.eq.s32.totalorder %v62, %v77
    %vm90 = vcmp.eq.s32.totalorder %v62, %v78
    %vm91 = vcmp.eq.s32.totalorder %v62, %v79
    %vm92 = vcmp.eq.s32.totalorder %v62, %v80
    %vm93 = vcmp.eq.s32.totalorder %v62, %v81
    %vm94 = vcmp.eq.s32.totalorder %v62, %v82
    %vm95 = vcmp.eq.s32.totalorder %v63, %v77
    %vm96 = vcmp.eq.s32.totalorder %v63, %v78
    %vm97 = vcmp.eq.s32.totalorder %v63, %v79
    %vm98 = vcmp.eq.s32.totalorder %v63, %v80
    %vm99 = vcmp.eq.s32.totalorder %v63, %v81
    %vm100 = vcmp.eq.s32.totalorder %v63, %v82
    %vm101 = vcmp.eq.s32.totalorder %v64, %v77
    %vm102 = vcmp.eq.s32.totalorder %v64, %v78
    %vm103 = vcmp.eq.s32.totalorder %v64, %v79
    %vm104 = vcmp.eq.s32.totalorder %v64, %v80
    %vm105 = vcmp.eq.s32.totalorder %v64, %v81
    %vm106 = vcmp.eq.s32.totalorder %v64, %v82
    %vm107 = vcmp.eq.s32.totalorder %v65, %v77
    %vm108 = vcmp.eq.s32.totalorder %v65, %v78
    %vm109 = vcmp.eq.s32.totalorder %v65, %v79
    %vm110 = vcmp.eq.s32.totalorder %v65, %v80
    %vm111 = vcmp.eq.s32.totalorder %v65, %v81
    %vm112 = vcmp.eq.s32.totalorder %v65, %v82
    %vm113 = vcmp.eq.s32.totalorder %v66, %v77
    %vm114 = vcmp.eq.s32.totalorder %v66, %v78
    %vm115 = vcmp.eq.s32.totalorder %v66, %v79
    %vm116 = vcmp.eq.s32.totalorder %v66, %v80
    %vm117 = vcmp.eq.s32.totalorder %v66, %v81
    %vm118 = vcmp.eq.s32.totalorder %v66, %v82
    %vm119 = vcmp.eq.s32.totalorder %v67, %v77
    %vm120 = vcmp.eq.s32.totalorder %v67, %v78
    %vm121 = vcmp.eq.s32.totalorder %v67, %v79
    %vm122 = vcmp.eq.s32.totalorder %v67, %v80
    %vm123 = vcmp.eq.s32.totalorder %v67, %v81
    %vm124 = vcmp.eq.s32.totalorder %v67, %v82
    %vm125 = vcmp.eq.s32.totalorder %v68, %v77
    %vm126 = vcmp.eq.s32.totalorder %v68, %v78
    %vm127 = vcmp.eq.s32.totalorder %v68, %v79
    %vm128 = vcmp.eq.s32.totalorder %v68, %v80
    %vm129 = vcmp.eq.s32.totalorder %v68, %v81
    %vm130 = vcmp.eq.s32.totalorder %v68, %v82
    %vm131 = vcmp.eq.s32.totalorder %v69, %v77
    %vm132 = vcmp.eq.s32.totalorder %v69, %v78
    %vm133 = vcmp.eq.s32.totalorder %v69, %v79
    %vm134 = vcmp.eq.s32.totalorder %v69, %v80
    %vm135 = vcmp.eq.s32.totalorder %v69, %v81
    %vm136 = vcmp.eq.s32.totalorder %v69, %v82
    %vm137 = vcmp.eq.s32.totalorder %v70, %v77
    %vm138 = vcmp.eq.s32.totalorder %v70, %v78
    %vm139 = vcmp.eq.s32.totalorder %v70, %v79
    %vm140 = vcmp.eq.s32.totalorder %v70, %v80
    %vm141 = vcmp.eq.s32.totalorder %v70, %v81
    %vm142 = vcmp.eq.s32.totalorder %v70, %v82
    %vm143 = vcmp.eq.s32.totalorder %v71, %v77
    %vm144 = vcmp.eq.s32.totalorder %v71, %v78
    %vm145 = vcmp.eq.s32.totalorder %v71, %v79
    %vm146 = vcmp.eq.s32.totalorder %v71, %v80
    %vm147 = vcmp.eq.s32.totalorder %v71, %v81
    %vm148 = vcmp.eq.s32.totalorder %v71, %v82
    %vm149 = vcmp.eq.s32.totalorder %v72, %v77
    %vm150 = vcmp.eq.s32.totalorder %v72, %v78
    %vm151 = vcmp.eq.s32.totalorder %v72, %v79
    %vm152 = vcmp.eq.s32.totalorder %v72, %v80
    %vm153 = vcmp.eq.s32.totalorder %v72, %v81
    %vm154 = vcmp.eq.s32.totalorder %v72, %v82
    %vm155 = vcmp.eq.s32.totalorder %v73, %v77
    %vm156 = vcmp.eq.s32.totalorder %v73, %v78
    %vm157 = vcmp.eq.s32.totalorder %v73, %v79
    %vm158 = vcmp.eq.s32.totalorder %v73, %v80
    %vm159 = vcmp.eq.s32.totalorder %v73, %v81
    %vm160 = vcmp.eq.s32.totalorder %v73, %v82
    %vm161 = vcmp.eq.s32.totalorder %v74, %v77
    %vm162 = vcmp.eq.s32.totalorder %v74, %v78
    %vm163 = vcmp.eq.s32.totalorder %v74, %v79
    %vm164 = vcmp.eq.s32.totalorder %v74, %v80
    %vm165 = vcmp.eq.s32.totalorder %v74, %v81
    %vm166 = vcmp.eq.s32.totalorder %v74, %v82
    %vm167 = vcmp.eq.s32.totalorder %v75, %v77
    %vm168 = vcmp.eq.s32.totalorder %v75, %v78
    %vm169 = vcmp.eq.s32.totalorder %v75, %v79
    %vm170 = vcmp.eq.s32.totalorder %v75, %v80
    %vm171 = vcmp.eq.s32.totalorder %v75, %v81
    %vm172 = vcmp.eq.s32.totalorder %v75, %v82
    %vm173 = vcmp.eq.s32.totalorder %v76, %v77
    %vm174 = vcmp.eq.s32.totalorder %v76, %v78
    %vm175 = vcmp.eq.s32.totalorder %v76, %v79
    %vm176 = vcmp.eq.s32.totalorder %v76, %v80
    %vm177 = vcmp.eq.s32.totalorder %v76, %v81
    %vm178 = vcmp.eq.s32.totalorder %v76, %v82
    %v179 = vsel %vm83, 1, 0
    %v180 = vsel %vm84, 1, 0
    %v181 = vsel %vm85, 1, 0
    %v182 = vsel %vm86, 1, 0
    %v183 = vsel %vm87, 1, 0
    %v184 = vsel %vm88, 1, 0
    %v185 = vsel %vm89, 1, 0
    %v186 = vsel %vm90, 1, 0
    %v187 = vsel %vm91, 1, 0
    %v188 = vsel %vm92, 1, 0
    %v189 = vsel %vm93, 1, 0
    %v190 = vsel %vm94, 1, 0
    %v191 = vsel %vm95, 1, 0
    %v192 = vsel %vm96, 1, 0
    %v193 = vsel %vm97, 1, 0
    %v194 = vsel %vm98, 1, 0
    %v195 = vsel %vm99, 1, 0
    %v196 = vsel %vm100, 1, 0
    %v197 = vsel %vm101, 1, 0
    %v198 = vsel %vm102, 1, 0
    %v199 = vsel %vm103, 1, 0
    %v200 = vsel %vm104, 1, 0
    %v201 = vsel %vm105, 1, 0
    %v202 = vsel %vm106, 1, 0
    %v203 = vsel %vm107, 1, 0
    %v204 = vsel %vm108, 1, 0
    %v205 = vsel %vm109, 1, 0
    %v206 = vsel %vm110, 1, 0
    %v207 = vsel %vm111, 1, 0
    %v208 = vsel %vm112, 1, 0
    %v209 = vsel %vm113, 1, 0
    %v210 = vsel %vm114, 1, 0
    %v211 = vsel %vm115, 1, 0
    %v212 = vsel %vm116, 1, 0
    %v213 = vsel %vm117, 1, 0
    %v214 = vsel %vm118, 1, 0
    %v215 = vsel %vm119, 1, 0
    %v216 = vsel %vm120, 1, 0
    %v217 = vsel %vm121, 1, 0
    %v218 = vsel %vm122, 1, 0
    %v219 = vsel %vm123, 1, 0
    %v220 = vsel %vm124, 1, 0
    %v221 = vsel %vm125, 1, 0
    %v222 = vsel %vm126, 1, 0
    %v223 = vsel %vm127, 1, 0
    %v224 = vsel %vm128, 1, 0
    %v225 = vsel %vm129, 1, 0
    %v226 = vsel %vm130, 1, 0
    %v227 = vsel %vm131, 1, 0
    %v228 = vsel %vm132, 1, 0
    %v229 = vsel %vm133, 1, 0
    %v230 = vsel %vm134, 1, 0
    %v231 = vsel %vm135, 1, 0
    %v232 = vsel %vm136, 1, 0
    %v233 = vsel %vm137, 1, 0
    %v234 = vsel %vm138, 1, 0
    %v235 = vsel %vm139, 1, 0
    %v236 = vsel %vm140, 1, 0
    %v237 = vsel %vm141, 1, 0
    %v238 = vsel %vm142, 1, 0
    %v239 = vsel %vm143, 1, 0
    %v240 = vsel %vm144, 1, 0
    %v241 = vsel %vm145, 1, 0
    %v242 = vsel %vm146, 1, 0
    %v243 = vsel %vm147, 1, 0
    %v244 = vsel %vm148, 1, 0
    %v245 = vsel %vm149, 1, 0
    %v246 = vsel %vm150, 1, 0
    %v247 = vsel %vm151, 1, 0
    %v248 = vsel %vm152, 1, 0
    %v249 = vsel %vm153, 1, 0
    %v250 = vsel %vm154, 1, 0
    %v251 = vsel %vm155, 1, 0
    %v252 = vsel %vm156, 1, 0
    %v253 = vsel %vm157, 1, 0
    %v254 = vsel %vm158, 1, 0
    %v255 = vsel %vm159, 1, 0
    %v256 = vsel %vm160, 1, 0
    %v257 = vsel %vm161, 1, 0
    %v258 = vsel %vm162, 1, 0
    %v259 = vsel %vm163, 1, 0
    %v260 = vsel %vm164, 1, 0
    %v261 = vsel %vm165, 1, 0
    %v262 = vsel %vm166, 1, 0
    %v263 = vsel %vm167, 1, 0
    %v264 = vsel %vm168, 1, 0
    %v265 = vsel %vm169, 1, 0
    %v266 = vsel %vm170, 1, 0
    %v267 = vsel %vm171, 1, 0
    %v268 = vsel %vm172, 1, 0
    %v269 = vsel %vm173, 1, 0
    %v270 = vsel %vm174, 1, 0
    %v271 = vsel %vm175, 1, 0
    %v272 = vsel %vm176, 1, 0
    %v273 = vsel %vm177, 1, 0
    %v274 = vsel %vm178, 1, 0
    %v275 = vcvt.s32.f32 %v179
    %v276 = vcvt.s32.f32 %v180
    %v277 = vcvt.s32.f32 %v181
    %v278 = vcvt.s32.f32 %v182
    %v279 = vcvt.s32.f32 %v183
    %v280 = vcvt.s32.f32 %v184
    %v281 = vcvt.s32.f32 %v185
    %v282 = vcvt.s32.f32 %v186
    %v283 = vcvt.s32.f32 %v187
    %v284 = vcvt.s32.f32 %v188
    %v285 = vcvt.s32.f32 %v189
    %v286 = vcvt.s32.f32 %v190
    %v287 = vcvt.s32.f32 %v191
    %v288 = vcvt.s32.f32 %v192
    %v289 = vcvt.s32.f32 %v193
    %v290 = vcvt.s32.f32 %v194
    %v291 = vcvt.s32.f32 %v195
    %v292 = vcvt.s32.f32 %v196
    %v293 = vcvt.s32.f32 %v197
    %v294 = vcvt.s32.f32 %v198
    %v295 = vcvt.s32.f32 %v199
    %v296 = vcvt.s32.f32 %v200
    %v297 = vcvt.s32.f32 %v201
    %v298 = vcvt.s32.f32 %v202
    %v299 = vcvt.s32.f32 %v203
    %v300 = vcvt.s32.f32 %v204
    %v301 = vcvt.s32.f32 %v205
    %v302 = vcvt.s32.f32 %v206
    %v303 = vcvt.s32.f32 %v207
    %v304 = vcvt.s32.f32 %v208
    %v305 = vcvt.s32.f32 %v209
    %v306 = vcvt.s32.f32 %v210
    %v307 = vcvt.s32.f32 %v211
    %v308 = vcvt.s32.f32 %v212
    %v309 = vcvt.s32.f32 %v213
    %v310 = vcvt.s32.f32 %v214
    %v311 = vcvt.s32.f32 %v215
    %v312 = vcvt.s32.f32 %v216
    %v313 = vcvt.s32.f32 %v217
    %v314 = vcvt.s32.f32 %v218
    %v315 = vcvt.s32.f32 %v219
    %v316 = vcvt.s32.f32 %v220
    %v317 = vcvt.s32.f32 %v221
    %v318 = vcvt.s32.f32 %v222
    %v319 = vcvt.s32.f32 %v223
    %v320 = vcvt.s32.f32 %v224
    %v321 = vcvt.s32.f32 %v225
    %v322 = vcvt.s32.f32 %v226
    %v323 = vcvt.s32.f32 %v227
    %v324 = vcvt.s32.f32 %v228
    %v325 = vcvt.s32.f32 %v229
    %v326 = vcvt.s32.f32 %v230
    %v327 = vcvt.s32.f32 %v231
    %v328 = vcvt.s32.f32 %v232
    %v329 = vcvt.s32.f32 %v233
    %v330 = vcvt.s32.f32 %v234
    %v331 = vcvt.s32.f32 %v235
    %v332 = vcvt.s32.f32 %v236
    %v333 = vcvt.s32.f32 %v237
    %v334 = vcvt.s32.f32 %v238
    %v335 = vcvt.s32.f32 %v239
    %v336 = vcvt.s32.f32 %v240
    %v337 = vcvt.s32.f32 %v241
    %v338 = vcvt.s32.f32 %v242
    %v339 = vcvt.s32.f32 %v243
    %v340 = vcvt.s32.f32 %v244
    %v341 = vcvt.s32.f32 %v245
    %v342 = vcvt.s32.f32 %v246
    %v343 = vcvt.s32.f32 %v247
    %v344 = vcvt.s32.f32 %v248
    %v345 = vcvt.s32.f32 %v249
    %v346 = vcvt.s32.f32 %v250
    %v347 = vcvt.s32.f32 %v251
    %v348 = vcvt.s32.f32 %v252
    %v349 = vcvt.s32.f32 %v253
    %v350 = vcvt.s32.f32 %v254
    %v351 = vcvt.s32.f32 %v255
    %v352 = vcvt.s32.f32 %v256
    %v353 = vcvt.s32.f32 %v257
    %v354 = vcvt.s32.f32 %v258
    %v355 = vcvt.s32.f32 %v259
    %v356 = vcvt.s32.f32 %v260
    %v357 = vcvt.s32.f32 %v261
    %v358 = vcvt.s32.f32 %v262
    %v359 = vcvt.s32.f32 %v263
    %v360 = vcvt.s32.f32 %v264
    %v361 = vcvt.s32.f32 %v265
    %v362 = vcvt.s32.f32 %v266
    %v363 = vcvt.s32.f32 %v267
    %v364 = vcvt.s32.f32 %v268
    %v365 = vcvt.s32.f32 %v269
    %v366 = vcvt.s32.f32 %v270
    %v367 = vcvt.s32.f32 %v271
    %v368 = vcvt.s32.f32 %v272
    %v369 = vcvt.s32.f32 %v273
    %v370 = vcvt.s32.f32 %v274
    %v371 = vpack.c.bf16 %v281, %v275
    %v372 = vpack.c.bf16 %v282, %v276
    %v373 = vpack.c.bf16 %v283, %v277
    %v374 = vpack.c.bf16 %v284, %v278
    %v375 = vpack.c.bf16 %v285, %v279
    %v376 = vpack.c.bf16 %v286, %v280
    %v377 = vpack.c.bf16 %v293, %v287
    %v378 = vpack.c.bf16 %v294, %v288
    %v379 = vpack.c.bf16 %v295, %v289
    %v380 = vpack.c.bf16 %v296, %v290
    %v381 = vpack.c.bf16 %v297, %v291
    %v382 = vpack.c.bf16 %v298, %v292
    %v383 = vpack.c.bf16 %v305, %v299
    %v384 = vpack.c.bf16 %v306, %v300
    %v385 = vpack.c.bf16 %v307, %v301
    %v386 = vpack.c.bf16 %v308, %v302
    %v387 = vpack.c.bf16 %v309, %v303
    %v388 = vpack.c.bf16 %v310, %v304
    %v389 = vpack.c.bf16 %v317, %v311
    %v390 = vpack.c.bf16 %v318, %v312
    %v391 = vpack.c.bf16 %v319, %v313
    %v392 = vpack.c.bf16 %v320, %v314
    %v393 = vpack.c.bf16 %v321, %v315
    %v394 = vpack.c.bf16 %v322, %v316
    %v395 = vpack.c.bf16 %v329, %v323
    %v396 = vpack.c.bf16 %v330, %v324
    %v397 = vpack.c.bf16 %v331, %v325
    %v398 = vpack.c.bf16 %v332, %v326
    %v399 = vpack.c.bf16 %v333, %v327
    %v400 = vpack.c.bf16 %v334, %v328
    %v401 = vpack.c.bf16 %v341, %v335
    %v402 = vpack.c.bf16 %v342, %v336
    %v403 = vpack.c.bf16 %v343, %v337
    %v404 = vpack.c.bf16 %v344, %v338
    %v405 = vpack.c.bf16 %v345, %v339
    %v406 = vpack.c.bf16 %v346, %v340
    %v407 = vpack.c.bf16 %v353, %v347
    %v408 = vpack.c.bf16 %v354, %v348
    %v409 = vpack.c.bf16 %v355, %v349
    %v410 = vpack.c.bf16 %v356, %v350
    %v411 = vpack.c.bf16 %v357, %v351
    %v412 = vpack.c.bf16 %v358, %v352
    %v413 = vpack.c.bf16 %v365, %v359
    %v414 = vpack.c.bf16 %v366, %v360
    %v415 = vpack.c.bf16 %v367, %v361
    %v416 = vpack.c.bf16 %v368, %v362
    %v417 = vpack.c.bf16 %v369, %v363
    %v418 = vpack.c.bf16 %v370, %v364
    %v419 = vld [vmem:[#allocation2] sm:$0xf]
    %v420 = vld [vmem:[#allocation2 + $0x4] sm:$0xf]
    %v421 = vld [vmem:[#allocation2 + $0x8] sm:$0xf]
    %v422 = vld [vmem:[#allocation2 + $0xc] sm:$0xf]
    %s423 = scalar_lea.vmem [#allocation2], 16
    %v424 = vld [vmem:[%s423] sm:$0xf]
    %v425 = vld [vmem:[%s423 + $0x4] sm:$0xf]
    %v426 = vld [vmem:[%s423 + $0x8] sm:$0xf]
    %v427 = vld [vmem:[%s423 + $0xc] sm:$0xf]
    %v432 = vunpack.c.l.b16 %v424
    %v433 = vunpack.c.l.b16 %v425
    %v434 = vunpack.c.l.b16 %v426
    %v435 = vunpack.c.l.b16 %v427
    %v436 = vpack.c.b16 %v433, %v432
    %v437 = vpack.c.b16 %v435, %v434
    %440 = vmatpush.bf16.msra.mxu0 %v413
    %441 = vmatpush.bf16.msra.mxu0 %v407
    %442 = vmatpush.bf16.msra.mxu0 %v401
    %443 = vmatpush.bf16.msra.mxu0 %v395
    %444 = vmatpush.bf16.msra.mxu0 %v389
    %445 = vmatpush.bf16.msra.mxu0 %v383
    %446 = vmatpush.bf16.msra.mxu0 %v377
    %447 = vmatpush.bf16.msra.mxu0 %v371
    %448 = vmatmul.bf16.gmra.mxu0 %v436
    %v449 = vpop.f32.mrf.mxu0
    %v450 = vadd.f32 0.0, %v449
    %v451 = vpop.f32.mrf.mxu0
    %v452 = vadd.f32 0.0, %v451
    %453 = vmatmul.bf16.gmra.mxu0 %v437
    %v454 = vpop.f32.mrf.mxu0
    %v455 = vadd.f32 0.0, %v454
    %v456 = vpop.f32.mrf.mxu0
    %v457 = vadd.f32 0.0, %v456
    %458 = vdwg.mxu0
    %459 = vmatpush.bf16.msra.mxu0 %v414
    %460 = vmatpush.bf16.msra.mxu0 %v408
    %461 = vmatpush.bf16.msra.mxu0 %v402
    %462 = vmatpush.bf16.msra.mxu0 %v396
    %463 = vmatpush.bf16.msra.mxu0 %v390
    %464 = vmatpush.bf16.msra.mxu0 %v384
    %465 = vmatpush.bf16.msra.mxu0 %v378
    %466 = vmatpush.bf16.msra.mxu0 %v372
    %467 = vmatmul.bf16.gmra.mxu0 %v436
    %v468 = vpop.f32.mrf.mxu0
    %v469 = vadd.f32 0.0, %v468
    %v470 = vpop.f32.mrf.mxu0
    %v471 = vadd.f32 0.0, %v470
    %472 = vmatmul.bf16.gmra.mxu0 %v437
    %v473 = vpop.f32.mrf.mxu0
    %v474 = vadd.f32 0.0, %v473
    %v475 = vpop.f32.mrf.mxu0
    %v476 = vadd.f32 0.0, %v475
    %477 = vdwg.mxu0
    %478 = vmatpush.bf16.msra.mxu0 %v415
    %479 = vmatpush.bf16.msra.mxu0 %v409
    %480 = vmatpush.bf16.msra.mxu0 %v403
    %481 = vmatpush.bf16.msra.mxu0 %v397
    %482 = vmatpush.bf16.msra.mxu0 %v391
    %483 = vmatpush.bf16.msra.mxu0 %v385
    %484 = vmatpush.bf16.msra.mxu0 %v379
    %485 = vmatpush.bf16.msra.mxu0 %v373
    %486 = vmatmul.bf16.gmra.mxu0 %v436
    %v487 = vpop.f32.mrf.mxu0
    %v488 = vadd.f32 0.0, %v487
    %v489 = vpop.f32.mrf.mxu0
    %v490 = vadd.f32 0.0, %v489
    %491 = vmatmul.bf16.gmra.mxu0 %v437
    %v492 = vpop.f32.mrf.mxu0
    %v493 = vadd.f32 0.0, %v492
    %v494 = vpop.f32.mrf.mxu0
    %v495 = vadd.f32 0.0, %v494
    %496 = vdwg.mxu0
    %497 = vmatpush.bf16.msra.mxu0 %v416
    %498 = vmatpush.bf16.msra.mxu0 %v410
    %499 = vmatpush.bf16.msra.mxu0 %v404
    %500 = vmatpush.bf16.msra.mxu0 %v398
    %501 = vmatpush.bf16.msra.mxu0 %v392
    %502 = vmatpush.bf16.msra.mxu0 %v386
    %503 = vmatpush.bf16.msra.mxu0 %v380
    %504 = vmatpush.bf16.msra.mxu0 %v374
    %505 = vmatmul.bf16.gmra.mxu0 %v436
    %v506 = vpop.f32.mrf.mxu0
    %v507 = vadd.f32 0.0, %v506
    %v508 = vpop.f32.mrf.mxu0
    %v509 = vadd.f32 0.0, %v508
    %510 = vmatmul.bf16.gmra.mxu0 %v437
    %v511 = vpop.f32.mrf.mxu0
    %v512 = vadd.f32 0.0, %v511
    %v513 = vpop.f32.mrf.mxu0
    %v514 = vadd.f32 0.0, %v513
    %515 = vdwg.mxu0
    %516 = vmatpush.bf16.msra.mxu0 %v417
    %517 = vmatpush.bf16.msra.mxu0 %v411
    %518 = vmatpush.bf16.msra.mxu0 %v405
    %519 = vmatpush.bf16.msra.mxu0 %v399
    %520 = vmatpush.bf16.msra.mxu0 %v393
    %521 = vmatpush.bf16.msra.mxu0 %v387
    %522 = vmatpush.bf16.msra.mxu0 %v381
    %523 = vmatpush.bf16.msra.mxu0 %v375
    %524 = vmatmul.bf16.gmra.mxu0 %v436
    %v525 = vpop.f32.mrf.mxu0
    %v526 = vadd.f32 0.0, %v525
    %v527 = vpop.f32.mrf.mxu0
    %v528 = vadd.f32 0.0, %v527
    %529 = vmatmul.bf16.gmra.mxu0 %v437
    %v530 = vpop.f32.mrf.mxu0
    %v531 = vadd.f32 0.0, %v530
    %v532 = vpop.f32.mrf.mxu0
    %v533 = vadd.f32 0.0, %v532
    %534 = vdwg.mxu0
    %535 = vmatpush.bf16.msra.mxu0 %v418
    %536 = vmatpush.bf16.msra.mxu0 %v412
    %537 = vmatpush.bf16.msra.mxu0 %v406
    %538 = vmatpush.bf16.msra.mxu0 %v400
    %539 = vmatpush.bf16.msra.mxu0 %v394
    %540 = vmatpush.bf16.msra.mxu0 %v388
    %541 = vmatpush.bf16.msra.mxu0 %v382
    %542 = vmatpush.bf16.msra.mxu0 %v376
    %543 = vmatmul.bf16.gmra.mxu0 %v436
    %v544 = vpop.f32.mrf.mxu0
    %v545 = vadd.f32 0.0, %v544
    %v546 = vpop.f32.mrf.mxu0
    %v547 = vadd.f32 0.0, %v546
    %548 = vmatmul.bf16.gmra.mxu0 %v437
    %v549 = vpop.f32.mrf.mxu0
    %v550 = vadd.f32 0.0, %v549
    %v551 = vpop.f32.mrf.mxu0
    %v552 = vadd.f32 0.0, %v551
    %553 = vdwg.mxu0
    %v558 = vunpack.c.l.b16 %v419
    %v559 = vunpack.c.l.b16 %v420
    %v560 = vunpack.c.l.b16 %v421
    %v561 = vunpack.c.l.b16 %v422
    %v562 = vpack.c.b16 %v559, %v558
    %v563 = vpack.c.b16 %v561, %v560
    %566 = vmatpush.bf16.msra.mxu0 %v413
    %567 = vmatpush.bf16.msra.mxu0 %v407
    %568 = vmatpush.bf16.msra.mxu0 %v401
    %569 = vmatpush.bf16.msra.mxu0 %v395
    %570 = vmatpush.bf16.msra.mxu0 %v389
    %571 = vmatpush.bf16.msra.mxu0 %v383
    %572 = vmatpush.bf16.msra.mxu0 %v377
    %573 = vmatpush.bf16.msra.mxu0 %v371
    %574 = vmatmul.bf16.gmra.mxu0 %v562
    %v575 = vpop.f32.mrf.mxu0
    %v576 = vadd.f32 %v450, %v575
    %v577 = vpop.f32.mrf.mxu0
    %v578 = vadd.f32 %v452, %v577
    %579 = vmatmul.bf16.gmra.mxu0 %v563
    %v580 = vpop.f32.mrf.mxu0
    %v581 = vadd.f32 %v455, %v580
    %v582 = vpop.f32.mrf.mxu0
    %v583 = vadd.f32 %v457, %v582
    %584 = vdwg.mxu0
    %585 = vmatpush.bf16.msra.mxu0 %v414
    %586 = vmatpush.bf16.msra.mxu0 %v408
    %587 = vmatpush.bf16.msra.mxu0 %v402
    %588 = vmatpush.bf16.msra.mxu0 %v396
    %589 = vmatpush.bf16.msra.mxu0 %v390
    %590 = vmatpush.bf16.msra.mxu0 %v384
    %591 = vmatpush.bf16.msra.mxu0 %v378
    %592 = vmatpush.bf16.msra.mxu0 %v372
    %593 = vmatmul.bf16.gmra.mxu0 %v562
    %v594 = vpop.f32.mrf.mxu0
    %v595 = vadd.f32 %v469, %v594
    %v596 = vpop.f32.mrf.mxu0
    %v597 = vadd.f32 %v471, %v596
    %598 = vmatmul.bf16.gmra.mxu0 %v563
    %v599 = vpop.f32.mrf.mxu0
    %v600 = vadd.f32 %v474, %v599
    %v601 = vpop.f32.mrf.mxu0
    %v602 = vadd.f32 %v476, %v601
    %603 = vdwg.mxu0
    %604 = vmatpush.bf16.msra.mxu0 %v415
    %605 = vmatpush.bf16.msra.mxu0 %v409
    %606 = vmatpush.bf16.msra.mxu0 %v403
    %607 = vmatpush.bf16.msra.mxu0 %v397
    %608 = vmatpush.bf16.msra.mxu0 %v391
    %609 = vmatpush.bf16.msra.mxu0 %v385
    %610 = vmatpush.bf16.msra.mxu0 %v379
    %611 = vmatpush.bf16.msra.mxu0 %v373
    %612 = vmatmul.bf16.gmra.mxu0 %v562
    %v613 = vpop.f32.mrf.mxu0
    %v614 = vadd.f32 %v488, %v613
    %v615 = vpop.f32.mrf.mxu0
    %v616 = vadd.f32 %v490, %v615
    %617 = vmatmul.bf16.gmra.mxu0 %v563
    %v618 = vpop.f32.mrf.mxu0
    %v619 = vadd.f32 %v493, %v618
    %v620 = vpop.f32.mrf.mxu0
    %v621 = vadd.f32 %v495, %v620
    %622 = vdwg.mxu0
    %623 = vmatpush.bf16.msra.mxu0 %v416
    %624 = vmatpush.bf16.msra.mxu0 %v410
    %625 = vmatpush.bf16.msra.mxu0 %v404
    %626 = vmatpush.bf16.msra.mxu0 %v398
    %627 = vmatpush.bf16.msra.mxu0 %v392
    %628 = vmatpush.bf16.msra.mxu0 %v386
    %629 = vmatpush.bf16.msra.mxu0 %v380
    %630 = vmatpush.bf16.msra.mxu0 %v374
    %631 = vmatmul.bf16.gmra.mxu0 %v562
    %v632 = vpop.f32.mrf.mxu0
    %v633 = vadd.f32 %v507, %v632
    %v634 = vpop.f32.mrf.mxu0
    %v635 = vadd.f32 %v509, %v634
    %636 = vmatmul.bf16.gmra.mxu0 %v563
    %v637 = vpop.f32.mrf.mxu0
    %v638 = vadd.f32 %v512, %v637
    %v639 = vpop.f32.mrf.mxu0
    %v640 = vadd.f32 %v514, %v639
    %641 = vdwg.mxu0
    %642 = vmatpush.bf16.msra.mxu0 %v417
    %643 = vmatpush.bf16.msra.mxu0 %v411
    %644 = vmatpush.bf16.msra.mxu0 %v405
    %645 = vmatpush.bf16.msra.mxu0 %v399
    %646 = vmatpush.bf16.msra.mxu0 %v393
    %647 = vmatpush.bf16.msra.mxu0 %v387
    %648 = vmatpush.bf16.msra.mxu0 %v381
    %649 = vmatpush.bf16.msra.mxu0 %v375
    %650 = vmatmul.bf16.gmra.mxu0 %v562
    %v651 = vpop.f32.mrf.mxu0
    %v652 = vadd.f32 %v526, %v651
    %v653 = vpop.f32.mrf.mxu0
    %v654 = vadd.f32 %v528, %v653
    %655 = vmatmul.bf16.gmra.mxu0 %v563
    %v656 = vpop.f32.mrf.mxu0
    %v657 = vadd.f32 %v531, %v656
    %v658 = vpop.f32.mrf.mxu0
    %v659 = vadd.f32 %v533, %v658
    %660 = vdwg.mxu0
    %661 = vmatpush.bf16.msra.mxu0 %v418
    %662 = vmatpush.bf16.msra.mxu0 %v412
    %663 = vmatpush.bf16.msra.mxu0 %v406
    %664 = vmatpush.bf16.msra.mxu0 %v400
    %665 = vmatpush.bf16.msra.mxu0 %v394
    %666 = vmatpush.bf16.msra.mxu0 %v388
    %667 = vmatpush.bf16.msra.mxu0 %v382
    %668 = vmatpush.bf16.msra.mxu0 %v376
    %669 = vmatmul.bf16.gmra.mxu0 %v562
    %v670 = vpop.f32.mrf.mxu0
    %v671 = vadd.f32 %v545, %v670
    %v672 = vpop.f32.mrf.mxu0
    %v673 = vadd.f32 %v547, %v672
    %674 = vmatmul.bf16.gmra.mxu0 %v563
    %v675 = vpop.f32.mrf.mxu0
    %v676 = vadd.f32 %v550, %v675
    %v677 = vpop.f32.mrf.mxu0
    %v678 = vadd.f32 %v552, %v677
    %679 = vdwg.mxu0
    %s680 = scalar_lea.vmem [#allocation2], 32
    %v681 = vld [vmem:[%s680] sm:$0xf]
    %v682 = vld [vmem:[%s680 + $0x4] sm:$0xf]
    %v683 = vld [vmem:[%s680 + $0x8] sm:$0xf]
    %v684 = vld [vmem:[%s680 + $0xc] sm:$0xf]
    %v689 = vunpack.c.l.b16 %v681
    %v690 = vunpack.c.l.b16 %v682
    %v691 = vunpack.c.l.b16 %v683
    %v692 = vunpack.c.l.b16 %v684
    %v693 = vpack.c.b16 %v690, %v689
    %v694 = vpack.c.b16 %v692, %v691
    %697 = vmatpush.bf16.msra.mxu0 %v413
    %698 = vmatpush.bf16.msra.mxu0 %v407
    %699 = vmatpush.bf16.msra.mxu0 %v401
    %700 = vmatpush.bf16.msra.mxu0 %v395
    %701 = vmatpush.bf16.msra.mxu0 %v389
    %702 = vmatpush.bf16.msra.mxu0 %v383
    %703 = vmatpush.bf16.msra.mxu0 %v377
    %704 = vmatpush.bf16.msra.mxu0 %v371
    %705 = vmatmul.bf16.gmra.mxu0 %v693
    %v706 = vpop.f32.mrf.mxu0
    %v707 = vadd.f32 0.0, %v706
    %v708 = vpop.f32.mrf.mxu0
    %v709 = vadd.f32 0.0, %v708
    %710 = vmatmul.bf16.gmra.mxu0 %v694
    %v711 = vpop.f32.mrf.mxu0
    %v712 = vadd.f32 0.0, %v711
    %v713 = vpop.f32.mrf.mxu0
    %v714 = vadd.f32 0.0, %v713
    %715 = vdwg.mxu0
    %716 = vmatpush.bf16.msra.mxu0 %v414
    %717 = vmatpush.bf16.msra.mxu0 %v408
    %718 = vmatpush.bf16.msra.mxu0 %v402
    %719 = vmatpush.bf16.msra.mxu0 %v396
    %720 = vmatpush.bf16.msra.mxu0 %v390
    %721 = vmatpush.bf16.msra.mxu0 %v384
    %722 = vmatpush.bf16.msra.mxu0 %v378
    %723 = vmatpush.bf16.msra.mxu0 %v372
    %724 = vmatmul.bf16.gmra.mxu0 %v693
    %v725 = vpop.f32.mrf.mxu0
    %v726 = vadd.f32 0.0, %v725
    %v727 = vpop.f32.mrf.mxu0
    %v728 = vadd.f32 0.0, %v727
    %729 = vmatmul.bf16.gmra.mxu0 %v694
    %v730 = vpop.f32.mrf.mxu0
    %v731 = vadd.f32 0.0, %v730
    %v732 = vpop.f32.mrf.mxu0
    %v733 = vadd.f32 0.0, %v732
    %734 = vdwg.mxu0
    %735 = vmatpush.bf16.msra.mxu0 %v415
    %736 = vmatpush.bf16.msra.mxu0 %v409
    %737 = vmatpush.bf16.msra.mxu0 %v403
    %738 = vmatpush.bf16.msra.mxu0 %v397
    %739 = vmatpush.bf16.msra.mxu0 %v391
    %740 = vmatpush.bf16.msra.mxu0 %v385
    %741 = vmatpush.bf16.msra.mxu0 %v379
    %742 = vmatpush.bf16.msra.mxu0 %v373
    %743 = vmatmul.bf16.gmra.mxu0 %v693
    %v744 = vpop.f32.mrf.mxu0
    %v745 = vadd.f32 0.0, %v744
    %v746 = vpop.f32.mrf.mxu0
    %v747 = vadd.f32 0.0, %v746
    %748 = vmatmul.bf16.gmra.mxu0 %v694
    %v749 = vpop.f32.mrf.mxu0
    %v750 = vadd.f32 0.0, %v749
    %v751 = vpop.f32.mrf.mxu0
    %v752 = vadd.f32 0.0, %v751
    %753 = vdwg.mxu0
    %754 = vmatpush.bf16.msra.mxu0 %v416
    %755 = vmatpush.bf16.msra.mxu0 %v410
    %756 = vmatpush.bf16.msra.mxu0 %v404
    %757 = vmatpush.bf16.msra.mxu0 %v398
    %758 = vmatpush.bf16.msra.mxu0 %v392
    %759 = vmatpush.bf16.msra.mxu0 %v386
    %760 = vmatpush.bf16.msra.mxu0 %v380
    %761 = vmatpush.bf16.msra.mxu0 %v374
    %762 = vmatmul.bf16.gmra.mxu0 %v693
    %v763 = vpop.f32.mrf.mxu0
    %v764 = vadd.f32 0.0, %v763
    %v765 = vpop.f32.mrf.mxu0
    %v766 = vadd.f32 0.0, %v765
    %767 = vmatmul.bf16.gmra.mxu0 %v694
    %v768 = vpop.f32.mrf.mxu0
    %v769 = vadd.f32 0.0, %v768
    %v770 = vpop.f32.mrf.mxu0
    %v771 = vadd.f32 0.0, %v770
    %772 = vdwg.mxu0
    %773 = vmatpush.bf16.msra.mxu0 %v417
    %774 = vmatpush.bf16.msra.mxu0 %v411
    %775 = vmatpush.bf16.msra.mxu0 %v405
    %776 = vmatpush.bf16.msra.mxu0 %v399
    %777 = vmatpush.bf16.msra.mxu0 %v393
    %778 = vmatpush.bf16.msra.mxu0 %v387
    %779 = vmatpush.bf16.msra.mxu0 %v381
    %780 = vmatpush.bf16.msra.mxu0 %v375
    %781 = vmatmul.bf16.gmra.mxu0 %v693
    %v782 = vpop.f32.mrf.mxu0
    %v783 = vadd.f32 0.0, %v782
    %v784 = vpop.f32.mrf.mxu0
    %v785 = vadd.f32 0.0, %v784
    %786 = vmatmul.bf16.gmra.mxu0 %v694
    %v787 = vpop.f32.mrf.mxu0
    %v788 = vadd.f32 0.0, %v787
    %v789 = vpop.f32.mrf.mxu0
    %v790 = vadd.f32 0.0, %v789
    %791 = vdwg.mxu0
    %792 = vmatpush.bf16.msra.mxu0 %v418
    %793 = vmatpush.bf16.msra.mxu0 %v412
    %794 = vmatpush.bf16.msra.mxu0 %v406
    %795 = vmatpush.bf16.msra.mxu0 %v400
    %796 = vmatpush.bf16.msra.mxu0 %v394
    %797 = vmatpush.bf16.msra.mxu0 %v388
    %798 = vmatpush.bf16.msra.mxu0 %v382
    %799 = vmatpush.bf16.msra.mxu0 %v376
    %800 = vmatmul.bf16.gmra.mxu0 %v693
    %v801 = vpop.f32.mrf.mxu0
    %v802 = vadd.f32 0.0, %v801
    %v803 = vpop.f32.mrf.mxu0
    %v804 = vadd.f32 0.0, %v803
    %805 = vmatmul.bf16.gmra.mxu0 %v694
    %v806 = vpop.f32.mrf.mxu0
    %v807 = vadd.f32 0.0, %v806
    %v808 = vpop.f32.mrf.mxu0
    %v809 = vadd.f32 0.0, %v808
    %810 = vdwg.mxu0
    %v811 = vadd.f32 %v576, %v707
    %v812 = vadd.f32 %v595, %v726
    %v813 = vadd.f32 %v614, %v745
    %v814 = vadd.f32 %v633, %v764
    %v815 = vadd.f32 %v652, %v783
    %v816 = vadd.f32 %v671, %v802
    %v817 = vadd.f32 %v578, %v709
    %v818 = vadd.f32 %v597, %v728
    %v819 = vadd.f32 %v616, %v747
    %v820 = vadd.f32 %v635, %v766
    %v821 = vadd.f32 %v654, %v785
    %v822 = vadd.f32 %v673, %v804
    %v823 = vadd.f32 %v581, %v712
    %v824 = vadd.f32 %v600, %v731
    %v825 = vadd.f32 %v619, %v750
    %v826 = vadd.f32 %v638, %v769
    %v827 = vadd.f32 %v657, %v788
    %v828 = vadd.f32 %v676, %v807
    %v829 = vadd.f32 %v583, %v714
    %v830 = vadd.f32 %v602, %v733
    %v831 = vadd.f32 %v621, %v752
    %v832 = vadd.f32 %v640, %v771
    %v833 = vadd.f32 %v659, %v790
    %v834 = vadd.f32 %v678, %v809
    %v835 = vsub.f32 %v813, %v815
    %v836 = vsub.f32 %v814, %v816
    %v837 = vsub.f32 %v819, %v821
    %v838 = vsub.f32 %v820, %v822
    %v839 = vsub.f32 %v825, %v827
    %v840 = vsub.f32 %v826, %v828
    %v841 = vsub.f32 %v831, %v833
    %v842 = vsub.f32 %v832, %v834
    %v843 = vadd.f32 %v813, %v815
    %v844 = vadd.f32 %v814, %v816
    %v845 = vadd.f32 %v819, %v821
    %v846 = vadd.f32 %v820, %v822
    %v847 = vadd.f32 %v825, %v827
    %v848 = vadd.f32 %v826, %v828
    %v849 = vadd.f32 %v831, %v833
    %v850 = vadd.f32 %v832, %v834
    %v851 = vmul.f32 %v811, 2.0
    %v852 = vmul.f32 %v812, 2.0
    %v853 = vmul.f32 %v817, 2.0
    %v854 = vmul.f32 %v818, 2.0
    %v855 = vmul.f32 %v823, 2.0
    %v856 = vmul.f32 %v824, 2.0
    %v857 = vmul.f32 %v829, 2.0
    %v858 = vmul.f32 %v830, 2.0
    %v859 = vsub.f32 %v843, %v851
    %v860 = vsub.f32 %v844, %v852
    %v861 = vsub.f32 %v845, %v853
    %v862 = vsub.f32 %v846, %v854
    %v863 = vsub.f32 %v847, %v855
    %v864 = vsub.f32 %v848, %v856
    %v865 = vsub.f32 %v849, %v857
    %v866 = vsub.f32 %v850, %v858
    %v867 = vmul.f32 %v835, %v859
    %v868 = vmul.f32 %v836, %v860
    %v869 = vmul.f32 %v837, %v861
    %v870 = vmul.f32 %v838, %v862
    %v871 = vmul.f32 %v839, %v863
    %v872 = vmul.f32 %v840, %v864
    %v873 = vmul.f32 %v841, %v865
    %v874 = vmul.f32 %v842, %v866
    %v875 = vadd.f32 %v867, %v869
    %v876 = vadd.f32 %v875, %v871
    %v877 = vadd.f32 %v876, %v873
    %v878 = vrot.slane %v877, 4
    %v879 = vadd.f32 %v877, %v878
    %v880 = vrot.slane %v879, 2
    %v881 = vadd.f32 %v879, %v880
    %v882 = vrot.slane %v881, 1
    %v883 = vadd.f32 %v881, %v882
    %v884 = vadd.f32 %v868, %v870
    %v885 = vadd.f32 %v884, %v872
    %v886 = vadd.f32 %v885, %v874
    %v887 = vrot.slane %v886, 4
    %v888 = vadd.f32 %v886, %v887
    %v889 = vrot.slane %v888, 2
    %v890 = vadd.f32 %v888, %v889
    %v891 = vrot.slane %v890, 1
    %v892 = vadd.f32 %v890, %v891
    %s893 = sld [smem:[#allocation6]]
    %v894 = vstv %s893
    %v895 = vadd.f32 %v883, %v894
    %v896 = vadd.f32 %v892, %v894
    %v897 = vmax.f32 %v895, 0.0
    %v898 = vmax.f32 %v896, 0.0
    %s899 = sadd.s32 0, 0
    %s900 = smul.u32 %s899, 256
    %v901 = vlaneseq
    %v902 = vand.u32 %v901, 127
    %v903 = vadd.s32 %v902, 128
    %v904 = vstv %s900
    %v905 = vadd.s32 %v904, %v902
    %v906 = vadd.s32 %v904, %v903
    %s907 = sld [smem:[#allocation5]]
    %v908 = vstv %s907
    %vm909 = vcmp.lt.s32.totalorder %v905, %v908
    %vm910 = vcmp.lt.s32.totalorder %v906, %v908
    %v911 = vsel %vm909, %v897, 0.0
    %v912 = vsel %vm910, %v898, 0.0
    %v913 = vld [vmem:[#allocation3] sm:$0x3]
    %v916 = vrot.slane %v912, 7
    %vm917 = vcmask 1040384
    %v918 = vsel %vm917, %v911, %v916
    %v920 = vadd.f32 %v913, %v918
    %v921 = vlaneseq
    %vm922 = vcmp.ge.s32.totalorder %v921, 0
    %vm923 = vcmp.lt.s32.totalorder %v921, 256
    %vm924 = vmand %vm922, %vm923
    %925 = vst.msk [vmem:[#allocation3] sm:$0x3] %vm924, %v920
    // Predicated region
    $region19: #{tpu_custom_call.1} parent=1 // pred_check
      %p926 = pneg %p32
    $region20: #{tpu_custom_call.1} parent=1 // pred_check_branch
      %928 = sbr.rel (%p926) target = $region22
    $region21: #{tpu_custom_call.1} parent=1 // pred_region
      %v929 = vld [vmem:[#allocation3] sm:$0x3]
      %v931 = vperm.slane %v929, 0
      %v932 = vperm.slane %v929, 1
      %v935 = vsel %vm917, %v931, 0.0
      %v936 = vsel %vm917, %v932, 0.0
      %v937 = vadd.f32 %v935, %v936
      %938 = vadd.xlane.f32.xlu0 %v937
      %v939 = vpop.xlane.xlu0 %938
      %v940 = vrot.slane %v939, 4
      %v941 = vadd.f32 %v939, %v940
      %v942 = vrot.slane %v941, 2
      %v943 = vadd.f32 %v941, %v942
      %v944 = vrot.slane %v943, 1
      %v945 = vadd.f32 %v943, %v944
      %s946 = vtos %v945
      %v947 = vstv %s946
      %948 = vst [vmem:[#allocation10] sm:$0xff] %v947
    $region22: #{tpu_custom_call.1} parent=1 // pred_fallthru
      _
    // Predicated region
    $region23: #{tpu_custom_call.1} parent=1 // pred_check
      _
    $region24: #{tpu_custom_call.1} parent=1 // pred_check_branch
      %950 = sbr.rel (0) target = $region26
    $region25: #{tpu_custom_call.1} parent=1 // pred_region
      %952 = vsyncadd [#allocation9], 0
      %s954 = sshll.u32 [#allocation10], 4
      %s955 = int_to_ptr.vmem [resolvable:$true] %s954
      %s956 = sshll.u32 %s4, 4
      %s957 = int_to_ptr.hbm [resolvable:$true] %s956
      %959 = dma.vmem_to_hbm [thread:$0]  %s955, 128, %s957, [#allocation9]
    $region26: #{tpu_custom_call.1} parent=1 // pred_fallthru
      _
    // Predicated region
    $region27: #{tpu_custom_call.1} parent=1 // pred_check
      _
    $region28: #{tpu_custom_call.1} parent=1 // pred_check_branch
      %961 = sbr.rel (0) target = $region30
    $region29: #{tpu_custom_call.1} parent=1 // pred_region
      %963 = dma.done [#allocation9], 128
    $region30: #{tpu_custom_call.1} parent=1 // pred_fallthru
      _
    %964 = vsyncpa [#allocation8], 1
    %965 = vsyncpa [#allocation9], 1

</llo_original>
